<compile_context>
chip_gen: v6e
topology: v6e:2x2x1
jax: 0.10.0
libtpu: 0.0.40
codegen_flags: <defaults>
</compile_context>

<pallas_src>
import jax
import jax.numpy as jnp
from jax.experimental import pallas as pl
from jax.experimental.pallas import tpu as pltpu

# ---- small, forward-consistent sizes ----------------------------------------
B        = 2     # batch
S_CONV   = 8     # conversation length
S_ANS    = 8     # answer length
IN_DIM   = 32    # args.in_dim  (== surrogate encoder hidden size)
EMB_DIM  = 32    # args.emb_dim (must equal IN_DIM for the pointer add to broadcast)
VOCAB    = 64    # surrogate vocab size
N_DOM    = 4     # number of domains

N_CONV_ROWS = B * S_CONV              # 16
N_ANS_ROWS  = B * S_ANS               # 16
N_ROWS      = N_CONV_ROWS + N_ANS_ROWS
HEADS_W     = 128                     # lane-dense packed head-output width

_VMEM = pl.BlockSpec(memory_space=pltpu.MemorySpace.VMEM)
_SMEM = pl.BlockSpec(memory_space=pltpu.MemorySpace.SMEM)


# =============================================================================
# Fused kernel: gather + verbalizer surrogate + max-pool + pointer + ranking
# =============================================================================
def _praline_kernel(ids_ref, dom_emb_ref, path_ref,
                    tok_table_ref, w_enc_ref, b_enc_ref, w_voc_ref, b_voc_ref,
                    dom_table_ref, wp_in_ref, bp_in_ref, wp_out_ref, bp_out_ref,
                    w1_ref, b1_ref, w2_ref, b2_ref,
                    logits_ref, heads_ref):
    f32 = jnp.float32

    # ---- token embedding gather as a one-hot MXU matmul ---------------------
    ids = ids_ref[...]                                            # (N_ROWS, 1) i32
    onehot = (ids == jax.lax.broadcasted_iota(jnp.int32, (N_ROWS, VOCAB), 1)
              ).astype(f32)                                       # (N_ROWS, V)
    emb = jnp.dot(onehot, tok_table_ref[...], preferred_element_type=f32)

    # ---- shared surrogate encoder (conv + answer rows in one 2D matmul) -----
    h = jnp.tanh(jnp.dot(emb, w_enc_ref[...], preferred_element_type=f32)
                 + b_enc_ref[...])                                # (N_ROWS, H)

    # encoder_last_hidden_state.max(dim=1) -> pooled conversation state
    pooled = jnp.max(h[:N_CONV_ROWS].reshape(B, S_CONV, IN_DIM), axis=1)  # (B, H)

    # decoder/vocab projection for the answer rows  (== logits.view(-1, V))
    logits_ref[...] = (jnp.dot(h[N_CONV_ROWS:], w_voc_ref[...],
                               preferred_element_type=f32) + b_voc_ref[...])

    # ---- DomainIdentificationPointer ----------------------------------------
    embed = (jnp.dot(dom_table_ref[...], wp_in_ref[...],
                     preferred_element_type=f32) + bp_in_ref[...])        # (D, E)
    xt = jnp.tanh(pooled[:, None, :] + embed[None, :, :])                 # (B, D, E)
    # NOTE: kept as VPU mul + lane reduce; at (2, 4, 32) the MXU reformulation
    # suggested in the review costs an extra relayout and buys nothing.
    dom_scores = jnp.sum(xt * wp_out_ref[...], axis=-1) + bp_out_ref[0, 0]  # (B, D)

    # ---- RankingModule: both LearnSequence MLPs via block-diag packed weights
    # x1 = [pooled | domain | path];  w1 is block-diagonal so columns 0:E are
    # learn_conv_domain layer 1 and columns E:2E are learn_path layer 1.
    x1 = jnp.concatenate([pooled, dom_emb_ref[...], path_ref[...]], axis=-1)  # (B, 3H)
    h1 = jnp.maximum(jnp.dot(x1, w1_ref[...], preferred_element_type=f32)
                     + b1_ref[...], 0.0)                                      # (B, 2E)
    rank = jnp.tanh(jnp.dot(h1, w2_ref[...], preferred_element_type=f32)
                    + b2_ref[...])                                            # (B, 2E)

    # ---- single lane-dense (B, 128) output slab ------------------------------
    pad = jnp.zeros((B, HEADS_W - 2 * EMB_DIM - N_DOM), f32)
    heads_ref[...] = jnp.concatenate([rank, dom_scores, pad], axis=-1)


def _praline_call(all_ids, domain_emb, path, p):
    args = (all_ids, domain_emb, path,
            p['tok_table'], p['w_enc'], p['b_enc'], p['w_voc'], p['b_voc'],
            p['dom_table'], p['wp_in'], p['bp_in'], p['wp_out'], p['bp_out'],
            p['w1'], p['b1'], p['w2'], p['b2'])
    in_specs = [_VMEM] * len(args)
    in_specs[12] = _SMEM                      # bp_out: (1,1) scalar in SMEM
    return pl.pallas_call(
        _praline_kernel,
        out_shape=(jax.ShapeDtypeStruct((N_ANS_ROWS, VOCAB), jnp.float32),
                   jax.ShapeDtypeStruct((B, HEADS_W), jnp.float32)),
        in_specs=in_specs,
        out_specs=(_VMEM, _VMEM),
        cost_estimate=pl.CostEstimate(flops=312_000, transcendentals=1_408,
                                      bytes_accessed=73_000),
    )(*args)


# =============================================================================
# Parameter init (deterministic, distinct keys) + full forward
# =============================================================================
def init_params(key):
    ks = jax.random.split(key, 18)
    n = lambda k, shape, s=0.1: (s * jax.random.normal(k, shape)).astype(jnp.float32)
    H, E = IN_DIM, EMB_DIM

    # per-layer weights mirroring the PyTorch module structure
    wc1 = n(ks[10], (2 * H, E)); bc1 = n(ks[11], (E,), 0.01)   # learn_conv_domain L1
    wc2 = n(ks[12], (E, E));     bc2 = n(ks[13], (E,), 0.01)   # learn_conv_domain L2
    wl1 = n(ks[14], (H, E));     bl1 = n(ks[15], (E,), 0.01)   # learn_path L1
    wl2 = n(ks[16], (E, E));     bl2 = n(ks[17], (E,), 0.01)   # learn_path L2

    # pack the two independent MLPs into block-diagonal weights (exact math)
    w1 = jnp.zeros((3 * H, 2 * E), jnp.float32)
    w1 = w1.at[:2 * H, :E].set(wc1).at[2 * H:, E:].set(wl1)
    b1 = jnp.concatenate([bc1, bl1])[None, :]                  # (1, 2E)
    w2 = jnp.zeros((2 * E, 2 * E), jnp.float32)
    w2 = w2.at[:E, :E].set(wc2).at[E:, E:].set(wl2)
    b2 = jnp.concatenate([bc2, bl2])[None, :]                  # (1, 2E)

    return {
        # surrogate BART
        'tok_table': n(ks[0], (VOCAB, H)),
        'w_enc': n(ks[1], (H, H)),
        'b_enc': n(ks[2], (1, H), 0.01),
        'w_voc': n(ks[3], (H, VOCAB)),
        'b_voc': n(ks[4], (1, VOCAB), 0.01),
        # domain pointer: linear_in (H->E), linear_out (E->1)
        'dom_table': n(ks[5], (N_DOM, H), 1.0),
        'wp_in': n(ks[6], (H, E)),
        'bp_in': n(ks[7], (1, E), 0.01),
        'wp_out': n(ks[8], (1, E)),
        'bp_out': n(ks[9], (1, 1), 0.01),
        # ranking module, packed
        'w1': w1, 'b1': b1, 'w2': w2, 'b2': b2,
    }


@jax.jit
def praline_forward(params, conversation_ids, answer_ids, domain_emb, path):
    # tiny int32 glue only: the embedding gather itself happens inside the kernel
    all_ids = jnp.concatenate(
        [conversation_ids.reshape(-1), answer_ids.reshape(-1)]
    ).astype(jnp.int32)[:, None]                                 # (N_ROWS, 1)

    logits, heads = _praline_call(all_ids, domain_emb, path, params)

    rank_conv  = heads[:, :EMB_DIM]
    rank_path  = heads[:, EMB_DIM:2 * EMB_DIM]
    dom_scores = heads[:, 2 * EMB_DIM:2 * EMB_DIM + N_DOM]

    return {
        'domain_identification': dom_scores,               # (B, N_DOM)
        'ranking': {'conversation': rank_conv,             # (B, EMB_DIM)
                    'path': rank_path},                    # (B, EMB_DIM)
        'verbalization': logits,                           # (B*Sa, VOCAB)
    }


if __name__ == "__main__":
    key = jax.random.PRNGKey(0)
    k_par, k_c, k_a, k_d, k_p = jax.random.split(key, 5)
    params = init_params(k_par)

    conversation_ids = jax.random.randint(k_c, (B, S_CONV), 0, VOCAB)
    answer_ids = jax.random.randint(k_a, (B, S_ANS), 0, VOCAB)
    domain_emb = jax.random.normal(k_d, (B, IN_DIM), dtype=jnp.float32)
    path = jax.random.normal(k_p, (B, IN_DIM), dtype=jnp.float32)

    out = praline_forward(params, conversation_ids, answer_ids, domain_emb, path)
    jax.block_until_ready(out)

    assert out['domain_identification'].shape == (B, N_DOM)
    assert out['ranking']['conversation'].shape == (B, EMB_DIM)
    assert out['ranking']['path'].shape == (B, EMB_DIM)
    assert out['verbalization'].shape == (B * S_ANS, VOCAB)
    assert all(bool(jnp.all(jnp.isfinite(v))) for v in
               (out['domain_identification'], out['ranking']['conversation'],
                out['ranking']['path'], out['verbalization']))
    print("KERNEL_OK")
</pallas_src>

<mosaic_0001>
module attributes {stable_mosaic.version = 11 : i64} {
  func.func @_praline_kernel(%arg0: memref<32x1xi32, #tpu.memory_space<vmem>>, %arg1: memref<2x32xf32, #tpu.memory_space<vmem>>, %arg2: memref<2x32xf32, #tpu.memory_space<vmem>>, %arg3: memref<64x32xf32, #tpu.memory_space<vmem>>, %arg4: memref<32x32xf32, #tpu.memory_space<vmem>>, %arg5: memref<1x32xf32, #tpu.memory_space<vmem>>, %arg6: memref<32x64xf32, #tpu.memory_space<vmem>>, %arg7: memref<1x64xf32, #tpu.memory_space<vmem>>, %arg8: memref<4x32xf32, #tpu.memory_space<vmem>>, %arg9: memref<32x32xf32, #tpu.memory_space<vmem>>, %arg10: memref<1x32xf32, #tpu.memory_space<vmem>>, %arg11: memref<1x32xf32, #tpu.memory_space<vmem>>, %arg12: memref<1x1xf32, #tpu.memory_space<smem>>, %arg13: memref<96x64xf32, #tpu.memory_space<vmem>>, %arg14: memref<1x64xf32, #tpu.memory_space<vmem>>, %arg15: memref<64x64xf32, #tpu.memory_space<vmem>>, %arg16: memref<1x64xf32, #tpu.memory_space<vmem>>, %arg17: memref<16x64xf32, #tpu.memory_space<vmem>>, %arg18: memref<2x128xf32, #tpu.memory_space<vmem>>) attributes {dimension_semantics = [], scalar_prefetch = 0 : i64, scratch_operands = 0 : i64, tpu.core_type = #tpu.core_type<tc>} {
    %c0 = arith.constant 0 : index
    %c0_0 = arith.constant 0 : index
    %0 = vector.load %arg0[%c0, %c0_0] : memref<32x1xi32, #tpu.memory_space<vmem>>, vector<32x1xi32>
    %1 = tpu.iota {dimensions = array<i32: 1>} : vector<32x64xi32>
    %2 = vector.broadcast %0 : vector<32x1xi32> to vector<32x64xi32>
    %3 = arith.cmpi eq, %2, %1 : vector<32x64xi32>
    %4 = arith.extui %3 : vector<32x64xi1> to vector<32x64xi32>
    %5 = arith.sitofp %4 : vector<32x64xi32> to vector<32x64xf32>
    %c0_1 = arith.constant 0 : index
    %c0_2 = arith.constant 0 : index
    %6 = vector.load %arg3[%c0_1, %c0_2] : memref<64x32xf32, #tpu.memory_space<vmem>>, vector<64x32xf32>
    %cst = arith.constant dense<0.000000e+00> : vector<32x32xf32>
    %7 = tpu.matmul %5, %6, %cst {dimension_numbers = #tpu.dot_dimension_numbers<[1], [0], [0], [1], [0, 0, 1, 1], [], []>} : vector<32x64xf32>, vector<64x32xf32>, vector<32x32xf32> -> vector<32x32xf32>
    %c0_3 = arith.constant 0 : index
    %c0_4 = arith.constant 0 : index
    %8 = vector.load %arg4[%c0_3, %c0_4] : memref<32x32xf32, #tpu.memory_space<vmem>>, vector<32x32xf32>
    %cst_5 = arith.constant dense<0.000000e+00> : vector<32x32xf32>
    %9 = tpu.matmul %7, %8, %cst_5 {dimension_numbers = #tpu.dot_dimension_numbers<[1], [0], [0], [1], [0, 0, 1, 1], [], []>} : vector<32x32xf32>, vector<32x32xf32>, vector<32x32xf32> -> vector<32x32xf32>
    %c0_6 = arith.constant 0 : index
    %c0_7 = arith.constant 0 : index
    %10 = vector.load %arg5[%c0_6, %c0_7] : memref<1x32xf32, #tpu.memory_space<vmem>>, vector<1x32xf32>
    %11 = vector.broadcast %10 : vector<1x32xf32> to vector<32x32xf32>
    %12 = arith.addf %9, %11 : vector<32x32xf32>
    %13 = math.tanh %12 : vector<32x32xf32>
    %14 = vector.extract_strided_slice %13 {offsets = [0, 0], sizes = [16, 32], strides = [1, 1]} : vector<32x32xf32> to vector<16x32xf32>
    %15 = vector.shape_cast %14 : vector<16x32xf32> to vector<2x8x32xf32>
    %cst_8 = arith.constant dense<0xFF800000> : vector<2x32xf32>
    %16 = vector.multi_reduction <maximumf>, %15, %cst_8 [1] : vector<2x8x32xf32> to vector<2x32xf32>
    %17 = vector.extract_strided_slice %13 {offsets = [16, 0], sizes = [16, 32], strides = [1, 1]} : vector<32x32xf32> to vector<16x32xf32>
    %c0_9 = arith.constant 0 : index
    %c0_10 = arith.constant 0 : index
    %18 = vector.load %arg6[%c0_9, %c0_10] : memref<32x64xf32, #tpu.memory_space<vmem>>, vector<32x64xf32>
    %cst_11 = arith.constant dense<0.000000e+00> : vector<16x64xf32>
    %19 = tpu.matmul %17, %18, %cst_11 {dimension_numbers = #tpu.dot_dimension_numbers<[1], [0], [0], [1], [0, 0, 1, 1], [], []>} : vector<16x32xf32>, vector<32x64xf32>, vector<16x64xf32> -> vector<16x64xf32>
    %c0_12 = arith.constant 0 : index
    %c0_13 = arith.constant 0 : index
    %20 = vector.load %arg7[%c0_12, %c0_13] : memref<1x64xf32, #tpu.memory_space<vmem>>, vector<1x64xf32>
    %21 = vector.broadcast %20 : vector<1x64xf32> to vector<16x64xf32>
    %22 = arith.addf %19, %21 : vector<16x64xf32>
    %c0_14 = arith.constant 0 : index
    %c0_15 = arith.constant 0 : index
    %23 = vector.load %arg17[%c0_14, %c0_15] : memref<16x64xf32, #tpu.memory_space<vmem>>, vector<16x64xf32>
    tpu.vector_store %arg17[%c0_14, %c0_15], %22 {strides = array<i32>} : memref<16x64xf32, #tpu.memory_space<vmem>>, vector<16x64xf32>,
    %c0_16 = arith.constant 0 : index
    %c0_17 = arith.constant 0 : index
    %24 = vector.load %arg8[%c0_16, %c0_17] : memref<4x32xf32, #tpu.memory_space<vmem>>, vector<4x32xf32>
    %c0_18 = arith.constant 0 : index
    %c0_19 = arith.constant 0 : index
    %25 = vector.load %arg9[%c0_18, %c0_19] : memref<32x32xf32, #tpu.memory_space<vmem>>, vector<32x32xf32>
    %cst_20 = arith.constant dense<0.000000e+00> : vector<4x32xf32>
    %26 = tpu.matmul %24, %25, %cst_20 {dimension_numbers = #tpu.dot_dimension_numbers<[1], [0], [0], [1], [0, 0, 1, 1], [], []>} : vector<4x32xf32>, vector<32x32xf32>, vector<4x32xf32> -> vector<4x32xf32>
    %c0_21 = arith.constant 0 : index
    %c0_22 = arith.constant 0 : index
    %27 = vector.load %arg10[%c0_21, %c0_22] : memref<1x32xf32, #tpu.memory_space<vmem>>, vector<1x32xf32>
    %28 = vector.broadcast %27 : vector<1x32xf32> to vector<4x32xf32>
    %29 = arith.addf %26, %28 : vector<4x32xf32>
    %30 = vector.shape_cast %16 : vector<2x32xf32> to vector<2x1x32xf32>
    %31 = vector.shape_cast %29 : vector<4x32xf32> to vector<1x4x32xf32>
    %32 = vector.broadcast %30 : vector<2x1x32xf32> to vector<2x4x32xf32>
    %33 = vector.broadcast %31 : vector<1x4x32xf32> to vector<2x4x32xf32>
    %34 = arith.addf %32, %33 : vector<2x4x32xf32>
    %35 = math.tanh %34 : vector<2x4x32xf32>
    %c0_23 = arith.constant 0 : index
    %c0_24 = arith.constant 0 : index
    %36 = vector.load %arg11[%c0_23, %c0_24] : memref<1x32xf32, #tpu.memory_space<vmem>>, vector<1x32xf32>
    %37 = vector.shape_cast %36 : vector<1x32xf32> to vector<1x1x32xf32>
    %38 = vector.broadcast %37 : vector<1x1x32xf32> to vector<2x4x32xf32>
    %39 = arith.mulf %35, %38 : vector<2x4x32xf32>
    %cst_25 = arith.constant dense<0.000000e+00> : vector<2x4xf32>
    %40 = vector.multi_reduction <add>, %39, %cst_25 [2] : vector<2x4x32xf32> to vector<2x4xf32>
    %c0_26 = arith.constant 0 : index
    %c0_27 = arith.constant 0 : index
    %41 = memref.load %arg12[%c0_26, %c0_27] : memref<1x1xf32, #tpu.memory_space<smem>>
    %42 = vector.broadcast %41 : f32 to vector<2x4xf32>
    %43 = arith.addf %40, %42 : vector<2x4xf32>
    %c0_28 = arith.constant 0 : index
    %c0_29 = arith.constant 0 : index
    %44 = vector.load %arg1[%c0_28, %c0_29] : memref<2x32xf32, #tpu.memory_space<vmem>>, vector<2x32xf32>
    %c0_30 = arith.constant 0 : index
    %c0_31 = arith.constant 0 : index
    %45 = vector.load %arg2[%c0_30, %c0_31] : memref<2x32xf32, #tpu.memory_space<vmem>>, vector<2x32xf32>
    %46 = tpu.concatenate %16, %44, %45 in 1 : vector<2x32xf32>, vector<2x32xf32>, vector<2x32xf32> -> vector<2x96xf32>
    %c0_32 = arith.constant 0 : index
    %c0_33 = arith.constant 0 : index
    %47 = vector.load %arg13[%c0_32, %c0_33] : memref<96x64xf32, #tpu.memory_space<vmem>>, vector<96x64xf32>
    %cst_34 = arith.constant dense<0.000000e+00> : vector<2x64xf32>
    %48 = tpu.matmul %46, %47, %cst_34 {dimension_numbers = #tpu.dot_dimension_numbers<[1], [0], [0], [1], [0, 0, 1, 1], [], []>} : vector<2x96xf32>, vector<96x64xf32>, vector<2x64xf32> -> vector<2x64xf32>
    %c0_35 = arith.constant 0 : index
    %c0_36 = arith.constant 0 : index
    %49 = vector.load %arg14[%c0_35, %c0_36] : memref<1x64xf32, #tpu.memory_space<vmem>>, vector<1x64xf32>
    %50 = vector.broadcast %49 : vector<1x64xf32> to vector<2x64xf32>
    %51 = arith.addf %48, %50 : vector<2x64xf32>
    %cst_37 = arith.constant 0.000000e+00 : f32
    %52 = vector.broadcast %cst_37 : f32 to vector<2x64xf32>
    %53 = arith.maximumf %51, %52 : vector<2x64xf32>
    %c0_38 = arith.constant 0 : index
    %c0_39 = arith.constant 0 : index
    %54 = vector.load %arg15[%c0_38, %c0_39] : memref<64x64xf32, #tpu.memory_space<vmem>>, vector<64x64xf32>
    %cst_40 = arith.constant dense<0.000000e+00> : vector<2x64xf32>
    %55 = tpu.matmul %53, %54, %cst_40 {dimension_numbers = #tpu.dot_dimension_numbers<[1], [0], [0], [1], [0, 0, 1, 1], [], []>} : vector<2x64xf32>, vector<64x64xf32>, vector<2x64xf32> -> vector<2x64xf32>
    %c0_41 = arith.constant 0 : index
    %c0_42 = arith.constant 0 : index
    %56 = vector.load %arg16[%c0_41, %c0_42] : memref<1x64xf32, #tpu.memory_space<vmem>>, vector<1x64xf32>
    %57 = vector.broadcast %56 : vector<1x64xf32> to vector<2x64xf32>
    %58 = arith.addf %55, %57 : vector<2x64xf32>
    %59 = math.tanh %58 : vector<2x64xf32>
    %cst_43 = arith.constant 0.000000e+00 : f32
    %60 = vector.broadcast %cst_43 : f32 to vector<2x60xf32>
    %61 = tpu.concatenate %59, %43, %60 in 1 : vector<2x64xf32>, vector<2x4xf32>, vector<2x60xf32> -> vector<2x128xf32>
    %c0_44 = arith.constant 0 : index
    %c0_45 = arith.constant 0 : index
    %62 = vector.load %arg18[%c0_44, %c0_45] : memref<2x128xf32, #tpu.memory_space<vmem>>, vector<2x128xf32>
    tpu.vector_store %arg18[%c0_44, %c0_45], %61 {strides = array<i32>} : memref<2x128xf32, #tpu.memory_space<vmem>>, vector<2x128xf32>,
    return
  }
}

</mosaic_0001>

<llo_original>
// kernel: praline_forward.1
$region0: #{praline_forward.1}
  #allocation0 [shape = 'u32[]', space=smem, size = 0x4, offset = 0x4, fixed_abs, tag = 'smem constant byte address 0x4 - core index']
  #allocation1 [shape = 'u32[144,128]{1,0:T(1,128)}', space=vmem, size = 0x12000, scoped, tag = 'internal scratch']
  #allocation2 [shape = 'f32[1,1]{1,0:T(1,128)S(6)}', space=smem, size = 0x200, scoped, tag = 'scoped memory for praline_forward.1']
  %s0 = inlined_call_operand.vmem [shape: s32[32,1], index: 0, kind: input, shape index: {}]
  %s1 = inlined_call_operand.vmem [shape: f32[2,32], index: 1, kind: input, shape index: {}]
  %s2 = inlined_call_operand.vmem [shape: f32[2,32], index: 2, kind: input, shape index: {}]
  %s3 = inlined_call_operand.vmem [shape: f32[64,32], index: 3, kind: input, shape index: {}]
  %s4 = inlined_call_operand.vmem [shape: f32[32,32], index: 4, kind: input, shape index: {}]
  %s5 = inlined_call_operand.vmem [shape: f32[1,32], index: 5, kind: input, shape index: {}]
  %s6 = inlined_call_operand.vmem [shape: f32[32,64], index: 6, kind: input, shape index: {}]
  %s7 = inlined_call_operand.vmem [shape: f32[1,64], index: 7, kind: input, shape index: {}]
  %s8 = inlined_call_operand.vmem [shape: f32[4,32], index: 8, kind: input, shape index: {}]
  %s9 = inlined_call_operand.vmem [shape: f32[32,32], index: 9, kind: input, shape index: {}]
  %s10 = inlined_call_operand.vmem [shape: f32[1,32], index: 10, kind: input, shape index: {}]
  %s11 = inlined_call_operand.vmem [shape: f32[1,32], index: 11, kind: input, shape index: {}]
  %s12 = inlined_call_operand.<no memory space> [shape: f32[1,1], index: 12, kind: input, shape index: {}]
  %s13 = inlined_call_operand.vmem [shape: f32[96,64], index: 13, kind: input, shape index: {}]
  %s14 = inlined_call_operand.vmem [shape: f32[1,64], index: 14, kind: input, shape index: {}]
  %s15 = inlined_call_operand.vmem [shape: f32[64,64], index: 15, kind: input, shape index: {}]
  %s16 = inlined_call_operand.vmem [shape: f32[1,64], index: 16, kind: input, shape index: {}]
  %s17 = inlined_call_operand.hbm [shape: f32[16,64], index: 17, kind: output, shape index: {0}]
  %s18 = inlined_call_operand.vmem [shape: f32[2,128], index: 18, kind: output, shape index: {1}]
  %19 = xla_tuple %s17, %s18
  %s20 = sld [smem:[#allocation0]]
  $region86: #{praline_forward.1} parent=0
    _
  %s22 = ssub.s32 1, %s20
  %s23 = scalar_select 0, %s22, %s20
  %24 = sst [smem:[#allocation2]] %s12
  $region1: #{praline_forward.1} parent=0
    #allocation3 [shape = 'u8[8192]{0}', space=vmem, size = 0x2000, scoped, tag = 'output window, operand 0, single buffered']
    #allocation4 [shape = 's32[1]{0}', space=sflag, size = 0x4, scoped, tag = 'scoped memory for praline_forward.1']
    %25 = vsyncpa [#allocation4], 0
    // Predicated region
    $region2: #{praline_forward.1} parent=1 // pred_check
      _
    $region3: #{praline_forward.1} parent=1 // pred_check_branch
      %27 = sbr.rel (0) target = $region5
    $region4: #{praline_forward.1} parent=1 // pred_region
      _
    $region5: #{praline_forward.1} parent=1 // pred_fallthru
      _
    // Predicated region
    $region6: #{praline_forward.1} parent=1 // pred_check
      _
    $region7: #{praline_forward.1} parent=1 // pred_check_branch
      %29 = sbr.rel (0) target = $region9
    $region8: #{praline_forward.1} parent=1 // pred_region
      _
    $region9: #{praline_forward.1} parent=1 // pred_fallthru
      _
    // Predicated region
    $region10: #{praline_forward.1} parent=1 // pred_check
      _
    $region11: #{praline_forward.1} parent=1 // pred_check_branch
      %31 = sbr.rel (0) target = $region13
    $region12: #{praline_forward.1} parent=1 // pred_region
      _
    $region13: #{praline_forward.1} parent=1 // pred_fallthru
      _
    // Predicated region
    $region14: #{praline_forward.1} parent=1 // pred_check
      _
    $region15: #{praline_forward.1} parent=1 // pred_check_branch
      %33 = sbr.rel (0) target = $region17
    $region16: #{praline_forward.1} parent=1 // pred_region
      _
    $region17: #{praline_forward.1} parent=1 // pred_fallthru
      _
    // Predicated region
    $region18: #{praline_forward.1} parent=1 // pred_check
      _
    $region19: #{praline_forward.1} parent=1 // pred_check_branch
      %35 = sbr.rel (0) target = $region21
    $region20: #{praline_forward.1} parent=1 // pred_region
      _
    $region21: #{praline_forward.1} parent=1 // pred_fallthru
      _
    // Predicated region
    $region22: #{praline_forward.1} parent=1 // pred_check
      _
    $region23: #{praline_forward.1} parent=1 // pred_check_branch
      %37 = sbr.rel (0) target = $region25
    $region24: #{praline_forward.1} parent=1 // pred_region
      _
    $region25: #{praline_forward.1} parent=1 // pred_fallthru
      _
    // Predicated region
    $region26: #{praline_forward.1} parent=1 // pred_check
      _
    $region27: #{praline_forward.1} parent=1 // pred_check_branch
      %39 = sbr.rel (0) target = $region29
    $region28: #{praline_forward.1} parent=1 // pred_region
      _
    $region29: #{praline_forward.1} parent=1 // pred_fallthru
      _
    // Predicated region
    $region30: #{praline_forward.1} parent=1 // pred_check
      _
    $region31: #{praline_forward.1} parent=1 // pred_check_branch
      %41 = sbr.rel (0) target = $region33
    $region32: #{praline_forward.1} parent=1 // pred_region
      _
    $region33: #{praline_forward.1} parent=1 // pred_fallthru
      _
    // Predicated region
    $region34: #{praline_forward.1} parent=1 // pred_check
      _
    $region35: #{praline_forward.1} parent=1 // pred_check_branch
      %43 = sbr.rel (0) target = $region37
    $region36: #{praline_forward.1} parent=1 // pred_region
      _
    $region37: #{praline_forward.1} parent=1 // pred_fallthru
      _
    // Predicated region
    $region38: #{praline_forward.1} parent=1 // pred_check
      _
    $region39: #{praline_forward.1} parent=1 // pred_check_branch
      %45 = sbr.rel (0) target = $region41
    $region40: #{praline_forward.1} parent=1 // pred_region
      _
    $region41: #{praline_forward.1} parent=1 // pred_fallthru
      _
    // Predicated region
    $region42: #{praline_forward.1} parent=1 // pred_check
      _
    $region43: #{praline_forward.1} parent=1 // pred_check_branch
      %47 = sbr.rel (0) target = $region45
    $region44: #{praline_forward.1} parent=1 // pred_region
      _
    $region45: #{praline_forward.1} parent=1 // pred_fallthru
      _
    // Predicated region
    $region46: #{praline_forward.1} parent=1 // pred_check
      _
    $region47: #{praline_forward.1} parent=1 // pred_check_branch
      %49 = sbr.rel (0) target = $region49
    $region48: #{praline_forward.1} parent=1 // pred_region
      _
    $region49: #{praline_forward.1} parent=1 // pred_fallthru
      _
    // Predicated region
    $region50: #{praline_forward.1} parent=1 // pred_check
      _
    $region51: #{praline_forward.1} parent=1 // pred_check_branch
      %51 = sbr.rel (0) target = $region53
    $region52: #{praline_forward.1} parent=1 // pred_region
      _
    $region53: #{praline_forward.1} parent=1 // pred_fallthru
      _
    // Predicated region
    $region54: #{praline_forward.1} parent=1 // pred_check
      _
    $region55: #{praline_forward.1} parent=1 // pred_check_branch
      %53 = sbr.rel (0) target = $region57
    $region56: #{praline_forward.1} parent=1 // pred_region
      _
    $region57: #{praline_forward.1} parent=1 // pred_fallthru
      _
    // Predicated region
    $region58: #{praline_forward.1} parent=1 // pred_check
      _
    $region59: #{praline_forward.1} parent=1 // pred_check_branch
      %55 = sbr.rel (0) target = $region61
    $region60: #{praline_forward.1} parent=1 // pred_region
      _
    $region61: #{praline_forward.1} parent=1 // pred_fallthru
      _
    // Predicated region
    $region62: #{praline_forward.1} parent=1 // pred_check
      _
    $region63: #{praline_forward.1} parent=1 // pred_check_branch
      %57 = sbr.rel (0) target = $region65
    $region64: #{praline_forward.1} parent=1 // pred_region
      _
    $region65: #{praline_forward.1} parent=1 // pred_fallthru
      _
    // Predicated region
    $region66: #{praline_forward.1} parent=1 // pred_check
      _
    $region67: #{praline_forward.1} parent=1 // pred_check_branch
      %59 = sbr.rel (0) target = $region69
    $region68: #{praline_forward.1} parent=1 // pred_region
      _
    $region69: #{praline_forward.1} parent=1 // pred_fallthru
      _
    %v60 = vld [vmem:[%s0] sm:$0xff]
    %v61 = vld [vmem:[%s0 + $0x8] sm:$0xff]
    %v62 = vld [vmem:[%s0 + $0x10] sm:$0xff]
    %v63 = vld [vmem:[%s0 + $0x18] sm:$0xff]
    %v64 = vlaneseq
    %v65 = vand.u32 %v64, 127
    %66 = vset.pattern.permute.xlu0 0
    %67 = vperm.xlu0 %66, %v60
    %v68 = vpop.permute.xlu0 %67
    %69 = vset.pattern.permute.xlu0 0
    %70 = vperm.xlu0 %69, %v61
    %v71 = vpop.permute.xlu0 %70
    %72 = vset.pattern.permute.xlu0 0
    %73 = vperm.xlu0 %72, %v62
    %v74 = vpop.permute.xlu0 %73
    %75 = vset.pattern.permute.xlu0 0
    %76 = vperm.xlu0 %75, %v63
    %v77 = vpop.permute.xlu0 %76
    %vm78 = vcmp.eq.s32.totalorder %v68, %v65
    %vm79 = vcmp.eq.s32.totalorder %v71, %v65
    %vm80 = vcmp.eq.s32.totalorder %v74, %v65
    %vm81 = vcmp.eq.s32.totalorder %v77, %v65
    %v82 = vsel %vm78, 1, 0
    %v83 = vsel %vm79, 1, 0
    %v84 = vsel %vm80, 1, 0
    %v85 = vsel %vm81, 1, 0
    %v86 = vcvt.s32.f32 %v82
    %v87 = vcvt.s32.f32 %v83
    %v88 = vcvt.s32.f32 %v84
    %v89 = vcvt.s32.f32 %v85
    %v90 = vld [vmem:[%s3] sm:$0xff]
    %v91 = vld [vmem:[%s3 + $0x8] sm:$0xff]
    %v92 = vld [vmem:[%s3 + $0x10] sm:$0xff]
    %v93 = vld [vmem:[%s3 + $0x18] sm:$0xff]
    %v94 = vld [vmem:[%s3 + $0x20] sm:$0xff]
    %v95 = vld [vmem:[%s3 + $0x28] sm:$0xff]
    %v96 = vld [vmem:[%s3 + $0x30] sm:$0xff]
    %v97 = vld [vmem:[%s3 + $0x38] sm:$0xff]
    %vm98 = vcmask 523264
    %v100 = vsel %vm98, %v86, 0
    %v103 = vsel %vm98, %v87, 0
    %v106 = vsel %vm98, %v88, 0
    %v109 = vsel %vm98, %v89, 0
    %111 = vmatprep.subr.mxu0 0.0
    %112 = vmatpush1.msra.mxu0 0.0
    %113 = vmatprep.subr.mxu0 0.0
    %114 = vmatpush1.msra.mxu0 0.0
    %115 = vmatprep.subr.mxu0 0.0
    %116 = vmatpush1.msra.mxu0 0.0
    %117 = vmatprep.subr.mxu0 0.0
    %118 = vmatpush1.msra.mxu0 0.0
    %119 = vmatprep.subr.mxu0 0.0
    %120 = vmatpush1.msra.mxu0 0.0
    %121 = vmatprep.subr.mxu0 0.0
    %122 = vmatpush1.msra.mxu0 0.0
    %123 = vmatprep.subr.mxu0 0.0
    %124 = vmatpush1.msra.mxu0 0.0
    %125 = vmatprep.subr.mxu0 0.0
    %126 = vmatpush1.msra.mxu0 0.0
    %127 = vmatprep.subr.mxu0 0.0
    %128 = vmatpush1.msra.mxu0 %v97
    %129 = vmatprep.subr.mxu0 0.0
    %130 = vmatpush1.msra.mxu0 %v96
    %131 = vmatprep.subr.mxu0 0.0
    %132 = vmatpush1.msra.mxu0 %v95
    %133 = vmatprep.subr.mxu0 0.0
    %134 = vmatpush1.msra.mxu0 %v94
    %135 = vmatprep.subr.mxu0 0.0
    %136 = vmatpush1.msra.mxu0 %v93
    %137 = vmatprep.subr.mxu0 0.0
    %138 = vmatpush1.msra.mxu0 %v92
    %139 = vmatprep.subr.mxu0 0.0
    %140 = vmatpush1.msra.mxu0 %v91
    %141 = vmatprep.subr.mxu0 0.0
    %142 = vmatpush1.msra.mxu0 %v90
    %143 = vmatprep.subr.mxu0 0.0
    %144 = vmatpush2.msra.mxu0 0.0
    %145 = vmatprep.subr.mxu0 0.0
    %146 = vmatpush2.msra.mxu0 0.0
    %147 = vmatprep.subr.mxu0 0.0
    %148 = vmatpush2.msra.mxu0 0.0
    %149 = vmatprep.subr.mxu0 0.0
    %150 = vmatpush2.msra.mxu0 0.0
    %151 = vmatprep.subr.mxu0 0.0
    %152 = vmatpush2.msra.mxu0 0.0
    %153 = vmatprep.subr.mxu0 0.0
    %154 = vmatpush2.msra.mxu0 0.0
    %155 = vmatprep.subr.mxu0 0.0
    %156 = vmatpush2.msra.mxu0 0.0
    %157 = vmatprep.subr.mxu0 0.0
    %158 = vmatpush2.msra.mxu0 0.0
    %159 = vmatprep.subr.mxu0 0.0
    %160 = vmatpush2.msra.mxu0 0.0
    %161 = vmatprep.subr.mxu0 0.0
    %162 = vmatpush2.msra.mxu0 0.0
    %163 = vmatprep.subr.mxu0 0.0
    %164 = vmatpush2.msra.mxu0 0.0
    %165 = vmatprep.subr.mxu0 0.0
    %166 = vmatpush2.msra.mxu0 0.0
    %167 = vmatprep.subr.mxu0 0.0
    %168 = vmatpush2.msra.mxu0 0.0
    %169 = vmatprep.subr.mxu0 0.0
    %170 = vmatpush2.msra.mxu0 0.0
    %171 = vmatprep.subr.mxu0 0.0
    %172 = vmatpush2.msra.mxu0 0.0
    %173 = vmatprep.subr.mxu0 0.0
    %174 = vmatpush2.msra.mxu0 0.0
    %175 = vmatprep.mubr.f32.mxu0 0.0
    %176 = vmatmul.mubr.f32.gmra.mxu0 %v100
    %v177 = vpop.f32.mrf.mxu0
    %v178 = vadd.f32 0.0, %v177
    %v179 = vpop.f32.mrf.mxu0
    %180 = vmatprep.mubr.f32.mxu0 0.0
    %181 = vmatmul.mubr.f32.gmra.mxu0 %v103
    %v182 = vpop.f32.mrf.mxu0
    %v183 = vadd.f32 0.0, %v182
    %v184 = vpop.f32.mrf.mxu0
    %185 = vmatprep.mubr.f32.mxu0 0.0
    %186 = vmatmul.mubr.f32.gmra.mxu0 %v106
    %v187 = vpop.f32.mrf.mxu0
    %v188 = vadd.f32 0.0, %v187
    %v189 = vpop.f32.mrf.mxu0
    %190 = vmatprep.mubr.f32.mxu0 0.0
    %191 = vmatmul.mubr.f32.gmra.mxu0 %v109
    %v192 = vpop.f32.mrf.mxu0
    %v193 = vadd.f32 0.0, %v192
    %v194 = vpop.f32.mrf.mxu0
    %195 = vdwg.mxu0
    %v196 = vld [vmem:[%s4] sm:$0xff]
    %v197 = vld [vmem:[%s4 + $0x8] sm:$0xff]
    %v198 = vld [vmem:[%s4 + $0x10] sm:$0xff]
    %v199 = vld [vmem:[%s4 + $0x18] sm:$0xff]
    %v200 = vld [vmem:[%s5] sm:$0x1]
    %v202 = vlaneseq
    %v203 = vshrl.u32 %v202, 7
    %v204 = vsub.s32 0, %v203
    %v205 = vrot.slane %v200, %v204
    %vm207 = vcmask 261120
    %v209 = vsel %vm207, %v178, 0
    %v212 = vsel %vm207, %v183, 0
    %v215 = vsel %vm207, %v188, 0
    %v218 = vsel %vm207, %v193, 0
    %220 = vmatprep.subr.mxu0 0.0
    %221 = vmatpush1.msra.mxu0 0.0
    %222 = vmatprep.subr.mxu0 0.0
    %223 = vmatpush1.msra.mxu0 0.0
    %224 = vmatprep.subr.mxu0 0.0
    %225 = vmatpush1.msra.mxu0 0.0
    %226 = vmatprep.subr.mxu0 0.0
    %227 = vmatpush1.msra.mxu0 0.0
    %228 = vmatprep.subr.mxu0 0.0
    %229 = vmatpush1.msra.mxu0 0.0
    %230 = vmatprep.subr.mxu0 0.0
    %231 = vmatpush1.msra.mxu0 0.0
    %232 = vmatprep.subr.mxu0 0.0
    %233 = vmatpush1.msra.mxu0 0.0
    %234 = vmatprep.subr.mxu0 0.0
    %235 = vmatpush1.msra.mxu0 0.0
    %236 = vmatprep.subr.mxu0 0.0
    %237 = vmatpush1.msra.mxu0 0.0
    %238 = vmatprep.subr.mxu0 0.0
    %239 = vmatpush1.msra.mxu0 0.0
    %240 = vmatprep.subr.mxu0 0.0
    %241 = vmatpush1.msra.mxu0 0.0
    %242 = vmatprep.subr.mxu0 0.0
    %243 = vmatpush1.msra.mxu0 0.0
    %244 = vmatprep.subr.mxu0 0.0
    %245 = vmatpush1.msra.mxu0 %v199
    %246 = vmatprep.subr.mxu0 0.0
    %247 = vmatpush1.msra.mxu0 %v198
    %248 = vmatprep.subr.mxu0 0.0
    %249 = vmatpush1.msra.mxu0 %v197
    %250 = vmatprep.subr.mxu0 0.0
    %251 = vmatpush1.msra.mxu0 %v196
    %252 = vmatprep.subr.mxu0 0.0
    %253 = vmatpush2.msra.mxu0 0.0
    %254 = vmatprep.subr.mxu0 0.0
    %255 = vmatpush2.msra.mxu0 0.0
    %256 = vmatprep.subr.mxu0 0.0
    %257 = vmatpush2.msra.mxu0 0.0
    %258 = vmatprep.subr.mxu0 0.0
    %259 = vmatpush2.msra.mxu0 0.0
    %260 = vmatprep.subr.mxu0 0.0
    %261 = vmatpush2.msra.mxu0 0.0
    %262 = vmatprep.subr.mxu0 0.0
    %263 = vmatpush2.msra.mxu0 0.0
    %264 = vmatprep.subr.mxu0 0.0
    %265 = vmatpush2.msra.mxu0 0.0
    %266 = vmatprep.subr.mxu0 0.0
    %267 = vmatpush2.msra.mxu0 0.0
    %268 = vmatprep.subr.mxu0 0.0
    %269 = vmatpush2.msra.mxu0 0.0
    %270 = vmatprep.subr.mxu0 0.0
    %271 = vmatpush2.msra.mxu0 0.0
    %272 = vmatprep.subr.mxu0 0.0
    %273 = vmatpush2.msra.mxu0 0.0
    %274 = vmatprep.subr.mxu0 0.0
    %275 = vmatpush2.msra.mxu0 0.0
    %276 = vmatprep.subr.mxu0 0.0
    %277 = vmatpush2.msra.mxu0 0.0
    %278 = vmatprep.subr.mxu0 0.0
    %279 = vmatpush2.msra.mxu0 0.0
    %280 = vmatprep.subr.mxu0 0.0
    %281 = vmatpush2.msra.mxu0 0.0
    %282 = vmatprep.subr.mxu0 0.0
    %283 = vmatpush2.msra.mxu0 0.0
    %284 = vmatprep.mubr.f32.mxu0 0.0
    %285 = vmatmul.mubr.f32.gmra.mxu0 %v209
    %v286 = vpop.f32.mrf.mxu0
    %v287 = vadd.f32 %v205, %v286
    %v288 = vpop.f32.mrf.mxu0
    %289 = vmatprep.mubr.f32.mxu0 0.0
    %290 = vmatmul.mubr.f32.gmra.mxu0 %v212
    %v291 = vpop.f32.mrf.mxu0
    %v292 = vadd.f32 %v205, %v291
    %v293 = vpop.f32.mrf.mxu0
    %294 = vmatprep.mubr.f32.mxu0 0.0
    %295 = vmatmul.mubr.f32.gmra.mxu0 %v215
    %v296 = vpop.f32.mrf.mxu0
    %v297 = vadd.f32 %v205, %v296
    %v298 = vpop.f32.mrf.mxu0
    %299 = vmatprep.mubr.f32.mxu0 0.0
    %300 = vmatmul.mubr.f32.gmra.mxu0 %v218
    %v301 = vpop.f32.mrf.mxu0
    %v302 = vadd.f32 %v205, %v301
    %v303 = vpop.f32.mrf.mxu0
    %304 = vdwg.mxu0
    %v305 = vtanh.pop %v287
    %v306 = vtanh.pop %v292
    %v307 = vtanh.pop %v297
    %v308 = vtanh.pop %v302
    %v309 = vsel %vm207, %v305, -inf
    %v310 = vrot.slane %v309, 4
    %v311 = vmax.f32 %v309, %v310
    %v312 = vrot.slane %v311, 2
    %v313 = vmax.f32 %v311, %v312
    %v314 = vrot.slane %v313, 1
    %v315 = vmax.f32 %v313, %v314
    %v316 = vsel %vm207, %v306, -inf
    %v317 = vrot.slane %v316, 4
    %v318 = vmax.f32 %v316, %v317
    %v319 = vrot.slane %v318, 2
    %v320 = vmax.f32 %v318, %v319
    %v321 = vrot.slane %v320, 1
    %v322 = vmax.f32 %v320, %v321
    %v323 = vld [vmem:[%s6] sm:$0xff]
    %v324 = vld [vmem:[%s6 + $0x8] sm:$0xff]
    %v325 = vld [vmem:[%s6 + $0x10] sm:$0xff]
    %v326 = vld [vmem:[%s6 + $0x18] sm:$0xff]
    %v327 = vld [vmem:[%s7] sm:$0x1]
    %v329 = vlaneseq
    %v330 = vshrl.u32 %v329, 7
    %v331 = vsub.s32 0, %v330
    %v332 = vrot.slane %v327, %v331
    %v335 = vsel %vm207, %v307, 0
    %v338 = vsel %vm207, %v308, 0
    %340 = vmatprep.subr.mxu0 0.0
    %341 = vmatpush1.msra.mxu0 0.0
    %342 = vmatprep.subr.mxu0 0.0
    %343 = vmatpush1.msra.mxu0 0.0
    %344 = vmatprep.subr.mxu0 0.0
    %345 = vmatpush1.msra.mxu0 0.0
    %346 = vmatprep.subr.mxu0 0.0
    %347 = vmatpush1.msra.mxu0 0.0
    %348 = vmatprep.subr.mxu0 0.0
    %349 = vmatpush1.msra.mxu0 0.0
    %350 = vmatprep.subr.mxu0 0.0
    %351 = vmatpush1.msra.mxu0 0.0
    %352 = vmatprep.subr.mxu0 0.0
    %353 = vmatpush1.msra.mxu0 0.0
    %354 = vmatprep.subr.mxu0 0.0
    %355 = vmatpush1.msra.mxu0 0.0
    %356 = vmatprep.subr.mxu0 0.0
    %357 = vmatpush1.msra.mxu0 0.0
    %358 = vmatprep.subr.mxu0 0.0
    %359 = vmatpush1.msra.mxu0 0.0
    %360 = vmatprep.subr.mxu0 0.0
    %361 = vmatpush1.msra.mxu0 0.0
    %362 = vmatprep.subr.mxu0 0.0
    %363 = vmatpush1.msra.mxu0 0.0
    %364 = vmatprep.subr.mxu0 0.0
    %365 = vmatpush1.msra.mxu0 %v326
    %366 = vmatprep.subr.mxu0 0.0
    %367 = vmatpush1.msra.mxu0 %v325
    %368 = vmatprep.subr.mxu0 0.0
    %369 = vmatpush1.msra.mxu0 %v324
    %370 = vmatprep.subr.mxu0 0.0
    %371 = vmatpush1.msra.mxu0 %v323
    %372 = vmatprep.subr.mxu0 0.0
    %373 = vmatpush2.msra.mxu0 0.0
    %374 = vmatprep.subr.mxu0 0.0
    %375 = vmatpush2.msra.mxu0 0.0
    %376 = vmatprep.subr.mxu0 0.0
    %377 = vmatpush2.msra.mxu0 0.0
    %378 = vmatprep.subr.mxu0 0.0
    %379 = vmatpush2.msra.mxu0 0.0
    %380 = vmatprep.subr.mxu0 0.0
    %381 = vmatpush2.msra.mxu0 0.0
    %382 = vmatprep.subr.mxu0 0.0
    %383 = vmatpush2.msra.mxu0 0.0
    %384 = vmatprep.subr.mxu0 0.0
    %385 = vmatpush2.msra.mxu0 0.0
    %386 = vmatprep.subr.mxu0 0.0
    %387 = vmatpush2.msra.mxu0 0.0
    %388 = vmatprep.subr.mxu0 0.0
    %389 = vmatpush2.msra.mxu0 0.0
    %390 = vmatprep.subr.mxu0 0.0
    %391 = vmatpush2.msra.mxu0 0.0
    %392 = vmatprep.subr.mxu0 0.0
    %393 = vmatpush2.msra.mxu0 0.0
    %394 = vmatprep.subr.mxu0 0.0
    %395 = vmatpush2.msra.mxu0 0.0
    %396 = vmatprep.subr.mxu0 0.0
    %397 = vmatpush2.msra.mxu0 0.0
    %398 = vmatprep.subr.mxu0 0.0
    %399 = vmatpush2.msra.mxu0 0.0
    %400 = vmatprep.subr.mxu0 0.0
    %401 = vmatpush2.msra.mxu0 0.0
    %402 = vmatprep.subr.mxu0 0.0
    %403 = vmatpush2.msra.mxu0 0.0
    %404 = vmatprep.mubr.f32.mxu0 0.0
    %405 = vmatmul.mubr.f32.gmra.mxu0 %v335
    %v406 = vpop.f32.mrf.mxu0
    %v407 = vadd.f32 %v332, %v406
    %v408 = vpop.f32.mrf.mxu0
    %409 = vmatprep.mubr.f32.mxu0 0.0
    %410 = vmatmul.mubr.f32.gmra.mxu0 %v338
    %v411 = vpop.f32.mrf.mxu0
    %v412 = vadd.f32 %v332, %v411
    %v413 = vpop.f32.mrf.mxu0
    %414 = vdwg.mxu0
    %415 = vst.msk [vmem:[#allocation3] sm:$0xff] %vm98, %v407
    %416 = vst.msk [vmem:[#allocation3 + $0x8] sm:$0xff] %vm98, %v412
    %v417 = vld [vmem:[%s8] sm:$0xf]
    %v418 = vld [vmem:[%s9] sm:$0xff]
    %v419 = vld [vmem:[%s9 + $0x8] sm:$0xff]
    %v420 = vld [vmem:[%s9 + $0x10] sm:$0xff]
    %v421 = vld [vmem:[%s9 + $0x18] sm:$0xff]
    %v422 = vld [vmem:[%s10] sm:$0x1]
    %v424 = vlaneseq
    %v425 = vshrl.u32 %v424, 7
    %v426 = vsub.s32 0, %v425
    %v427 = vrot.slane %v422, %v426
    %v430 = vsel %vm207, %v417, 0
    %432 = vmatprep.subr.mxu0 0.0
    %433 = vmatpush1.msra.mxu0 0.0
    %434 = vmatprep.subr.mxu0 0.0
    %435 = vmatpush1.msra.mxu0 0.0
    %436 = vmatprep.subr.mxu0 0.0
    %437 = vmatpush1.msra.mxu0 0.0
    %438 = vmatprep.subr.mxu0 0.0
    %439 = vmatpush1.msra.mxu0 0.0
    %440 = vmatprep.subr.mxu0 0.0
    %441 = vmatpush1.msra.mxu0 0.0
    %442 = vmatprep.subr.mxu0 0.0
    %443 = vmatpush1.msra.mxu0 0.0
    %444 = vmatprep.subr.mxu0 0.0
    %445 = vmatpush1.msra.mxu0 0.0
    %446 = vmatprep.subr.mxu0 0.0
    %447 = vmatpush1.msra.mxu0 0.0
    %448 = vmatprep.subr.mxu0 0.0
    %449 = vmatpush1.msra.mxu0 0.0
    %450 = vmatprep.subr.mxu0 0.0
    %451 = vmatpush1.msra.mxu0 0.0
    %452 = vmatprep.subr.mxu0 0.0
    %453 = vmatpush1.msra.mxu0 0.0
    %454 = vmatprep.subr.mxu0 0.0
    %455 = vmatpush1.msra.mxu0 0.0
    %456 = vmatprep.subr.mxu0 0.0
    %457 = vmatpush1.msra.mxu0 %v421
    %458 = vmatprep.subr.mxu0 0.0
    %459 = vmatpush1.msra.mxu0 %v420
    %460 = vmatprep.subr.mxu0 0.0
    %461 = vmatpush1.msra.mxu0 %v419
    %462 = vmatprep.subr.mxu0 0.0
    %463 = vmatpush1.msra.mxu0 %v418
    %464 = vmatprep.subr.mxu0 0.0
    %465 = vmatpush2.msra.mxu0 0.0
    %466 = vmatprep.subr.mxu0 0.0
    %467 = vmatpush2.msra.mxu0 0.0
    %468 = vmatprep.subr.mxu0 0.0
    %469 = vmatpush2.msra.mxu0 0.0
    %470 = vmatprep.subr.mxu0 0.0
    %471 = vmatpush2.msra.mxu0 0.0
    %472 = vmatprep.subr.mxu0 0.0
    %473 = vmatpush2.msra.mxu0 0.0
    %474 = vmatprep.subr.mxu0 0.0
    %475 = vmatpush2.msra.mxu0 0.0
    %476 = vmatprep.subr.mxu0 0.0
    %477 = vmatpush2.msra.mxu0 0.0
    %478 = vmatprep.subr.mxu0 0.0
    %479 = vmatpush2.msra.mxu0 0.0
    %480 = vmatprep.subr.mxu0 0.0
    %481 = vmatpush2.msra.mxu0 0.0
    %482 = vmatprep.subr.mxu0 0.0
    %483 = vmatpush2.msra.mxu0 0.0
    %484 = vmatprep.subr.mxu0 0.0
    %485 = vmatpush2.msra.mxu0 0.0
    %486 = vmatprep.subr.mxu0 0.0
    %487 = vmatpush2.msra.mxu0 0.0
    %488 = vmatprep.subr.mxu0 0.0
    %489 = vmatpush2.msra.mxu0 0.0
    %490 = vmatprep.subr.mxu0 0.0
    %491 = vmatpush2.msra.mxu0 0.0
    %492 = vmatprep.subr.mxu0 0.0
    %493 = vmatpush2.msra.mxu0 0.0
    %494 = vmatprep.subr.mxu0 0.0
    %495 = vmatpush2.msra.mxu0 0.0
    %496 = vmatprep.mubr.f32.mxu0 0.0
    %497 = vmatmul.mubr.f32.gmra.mxu0 %v430
    %v498 = vpop.f32.mrf.mxu0
    %v499 = vadd.f32 %v427, %v498
    %v500 = vpop.f32.mrf.mxu0
    %501 = vdwg.mxu0
    %v502 = vadd.f32 %v315, %v499
    %v503 = vadd.f32 %v322, %v499
    %v504 = vtanh.pop %v502
    %v505 = vtanh.pop %v503
    %v506 = vld [vmem:[%s11] sm:$0x1]
    %v508 = vlaneseq
    %v509 = vshrl.u32 %v508, 7
    %v510 = vsub.s32 0, %v509
    %v511 = vrot.slane %v506, %v510
    %v513 = vmul.f32 %v504, %v511
    %v514 = vmul.f32 %v505, %v511
    %vm515 = vcmask 257024
    %v516 = vsel %vm515, %v513, 0.0
    %517 = vadd.xlane.f32.xlu0 %v516
    %v518 = vpop.xlane.xlu0 %517
    %v519 = vsel %vm515, %v514, 0.0
    %520 = vadd.xlane.f32.xlu0 %v519
    %v521 = vpop.xlane.xlu0 %520
    %s522 = sld [smem:[#allocation2]]
    %v523 = vstv %s522
    %v524 = vadd.f32 %v518, %v523
    %v525 = vadd.f32 %v521, %v523
    %v526 = vld [vmem:[%s1] sm:$0x3]
    %v527 = vld [vmem:[%s2] sm:$0x3]
    %vm530 = vcmask 1041409
    %v531 = vsel %vm530, %v322, %v315
    %534 = vrot.lane.b32.xlu0 %v526, 32
    %v535 = vpop.permute.xlu0 %534
    %538 = vrot.lane.b32.xlu0 %v527, 64
    %v539 = vpop.permute.xlu0 %538
    %v541 = vsel %vm207, %v531, %v535
    %v542 = vsel %vm98, %v541, %v539
    %v543 = vld [vmem:[%s13] sm:$0xff]
    %v544 = vld [vmem:[%s13 + $0x8] sm:$0xff]
    %v545 = vld [vmem:[%s13 + $0x10] sm:$0xff]
    %v546 = vld [vmem:[%s13 + $0x18] sm:$0xff]
    %v547 = vld [vmem:[%s13 + $0x20] sm:$0xff]
    %v548 = vld [vmem:[%s13 + $0x28] sm:$0xff]
    %v549 = vld [vmem:[%s13 + $0x30] sm:$0xff]
    %v550 = vld [vmem:[%s13 + $0x38] sm:$0xff]
    %v551 = vld [vmem:[%s13 + $0x40] sm:$0xff]
    %v552 = vld [vmem:[%s13 + $0x48] sm:$0xff]
    %v553 = vld [vmem:[%s13 + $0x50] sm:$0xff]
    %v554 = vld [vmem:[%s13 + $0x58] sm:$0xff]
    %v555 = vld [vmem:[%s14] sm:$0x1]
    %v557 = vlaneseq
    %v558 = vshrl.u32 %v557, 7
    %v559 = vsub.s32 0, %v558
    %v560 = vrot.slane %v555, %v559
    %vm562 = vcmask 785408
    %v564 = vsel %vm562, %v542, 0
    %566 = vmatprep.subr.mxu0 0.0
    %567 = vmatpush1.msra.mxu0 0.0
    %568 = vmatprep.subr.mxu0 0.0
    %569 = vmatpush1.msra.mxu0 0.0
    %570 = vmatprep.subr.mxu0 0.0
    %571 = vmatpush1.msra.mxu0 0.0
    %572 = vmatprep.subr.mxu0 0.0
    %573 = vmatpush1.msra.mxu0 0.0
    %574 = vmatprep.subr.mxu0 0.0
    %575 = vmatpush1.msra.mxu0 %v554
    %576 = vmatprep.subr.mxu0 0.0
    %577 = vmatpush1.msra.mxu0 %v553
    %578 = vmatprep.subr.mxu0 0.0
    %579 = vmatpush1.msra.mxu0 %v552
    %580 = vmatprep.subr.mxu0 0.0
    %581 = vmatpush1.msra.mxu0 %v551
    %582 = vmatprep.subr.mxu0 0.0
    %583 = vmatpush1.msra.mxu0 %v550
    %584 = vmatprep.subr.mxu0 0.0
    %585 = vmatpush1.msra.mxu0 %v549
    %586 = vmatprep.subr.mxu0 0.0
    %587 = vmatpush1.msra.mxu0 %v548
    %588 = vmatprep.subr.mxu0 0.0
    %589 = vmatpush1.msra.mxu0 %v547
    %590 = vmatprep.subr.mxu0 0.0
    %591 = vmatpush1.msra.mxu0 %v546
    %592 = vmatprep.subr.mxu0 0.0
    %593 = vmatpush1.msra.mxu0 %v545
    %594 = vmatprep.subr.mxu0 0.0
    %595 = vmatpush1.msra.mxu0 %v544
    %596 = vmatprep.subr.mxu0 0.0
    %597 = vmatpush1.msra.mxu0 %v543
    %598 = vmatprep.subr.mxu0 0.0
    %599 = vmatpush2.msra.mxu0 0.0
    %600 = vmatprep.subr.mxu0 0.0
    %601 = vmatpush2.msra.mxu0 0.0
    %602 = vmatprep.subr.mxu0 0.0
    %603 = vmatpush2.msra.mxu0 0.0
    %604 = vmatprep.subr.mxu0 0.0
    %605 = vmatpush2.msra.mxu0 0.0
    %606 = vmatprep.subr.mxu0 0.0
    %607 = vmatpush2.msra.mxu0 0.0
    %608 = vmatprep.subr.mxu0 0.0
    %609 = vmatpush2.msra.mxu0 0.0
    %610 = vmatprep.subr.mxu0 0.0
    %611 = vmatpush2.msra.mxu0 0.0
    %612 = vmatprep.subr.mxu0 0.0
    %613 = vmatpush2.msra.mxu0 0.0
    %614 = vmatprep.subr.mxu0 0.0
    %615 = vmatpush2.msra.mxu0 0.0
    %616 = vmatprep.subr.mxu0 0.0
    %617 = vmatpush2.msra.mxu0 0.0
    %618 = vmatprep.subr.mxu0 0.0
    %619 = vmatpush2.msra.mxu0 0.0
    %620 = vmatprep.subr.mxu0 0.0
    %621 = vmatpush2.msra.mxu0 0.0
    %622 = vmatprep.subr.mxu0 0.0
    %623 = vmatpush2.msra.mxu0 0.0
    %624 = vmatprep.subr.mxu0 0.0
    %625 = vmatpush2.msra.mxu0 0.0
    %626 = vmatprep.subr.mxu0 0.0
    %627 = vmatpush2.msra.mxu0 0.0
    %628 = vmatprep.subr.mxu0 0.0
    %629 = vmatpush2.msra.mxu0 0.0
    %630 = vmatprep.mubr.f32.mxu0 0.0
    %631 = vmatmul.mubr.f32.gmra.mxu0 %v564
    %v632 = vpop.f32.mrf.mxu0
    %v633 = vadd.f32 %v560, %v632
    %v634 = vpop.f32.mrf.mxu0
    %635 = vdwg.mxu0
    %v636 = vmax.f32 %v633, 0.0
    %v637 = vld [vmem:[%s15] sm:$0xff]
    %v638 = vld [vmem:[%s15 + $0x8] sm:$0xff]
    %v639 = vld [vmem:[%s15 + $0x10] sm:$0xff]
    %v640 = vld [vmem:[%s15 + $0x18] sm:$0xff]
    %v641 = vld [vmem:[%s15 + $0x20] sm:$0xff]
    %v642 = vld [vmem:[%s15 + $0x28] sm:$0xff]
    %v643 = vld [vmem:[%s15 + $0x30] sm:$0xff]
    %v644 = vld [vmem:[%s15 + $0x38] sm:$0xff]
    %v645 = vld [vmem:[%s16] sm:$0x1]
    %v647 = vlaneseq
    %v648 = vshrl.u32 %v647, 7
    %v649 = vsub.s32 0, %v648
    %v650 = vrot.slane %v645, %v649
    %v653 = vsel %vm98, %v636, 0
    %655 = vmatprep.subr.mxu0 0.0
    %656 = vmatpush1.msra.mxu0 0.0
    %657 = vmatprep.subr.mxu0 0.0
    %658 = vmatpush1.msra.mxu0 0.0
    %659 = vmatprep.subr.mxu0 0.0
    %660 = vmatpush1.msra.mxu0 0.0
    %661 = vmatprep.subr.mxu0 0.0
    %662 = vmatpush1.msra.mxu0 0.0
    %663 = vmatprep.subr.mxu0 0.0
    %664 = vmatpush1.msra.mxu0 0.0
    %665 = vmatprep.subr.mxu0 0.0
    %666 = vmatpush1.msra.mxu0 0.0
    %667 = vmatprep.subr.mxu0 0.0
    %668 = vmatpush1.msra.mxu0 0.0
    %669 = vmatprep.subr.mxu0 0.0
    %670 = vmatpush1.msra.mxu0 0.0
    %671 = vmatprep.subr.mxu0 0.0
    %672 = vmatpush1.msra.mxu0 %v644
    %673 = vmatprep.subr.mxu0 0.0
    %674 = vmatpush1.msra.mxu0 %v643
    %675 = vmatprep.subr.mxu0 0.0
    %676 = vmatpush1.msra.mxu0 %v642
    %677 = vmatprep.subr.mxu0 0.0
    %678 = vmatpush1.msra.mxu0 %v641
    %679 = vmatprep.subr.mxu0 0.0
    %680 = vmatpush1.msra.mxu0 %v640
    %681 = vmatprep.subr.mxu0 0.0
    %682 = vmatpush1.msra.mxu0 %v639
    %683 = vmatprep.subr.mxu0 0.0
    %684 = vmatpush1.msra.mxu0 %v638
    %685 = vmatprep.subr.mxu0 0.0
    %686 = vmatpush1.msra.mxu0 %v637
    %687 = vmatprep.subr.mxu0 0.0
    %688 = vmatpush2.msra.mxu0 0.0
    %689 = vmatprep.subr.mxu0 0.0
    %690 = vmatpush2.msra.mxu0 0.0
    %691 = vmatprep.subr.mxu0 0.0
    %692 = vmatpush2.msra.mxu0 0.0
    %693 = vmatprep.subr.mxu0 0.0
    %694 = vmatpush2.msra.mxu0 0.0
    %695 = vmatprep.subr.mxu0 0.0
    %696 = vmatpush2.msra.mxu0 0.0
    %697 = vmatprep.subr.mxu0 0.0
    %698 = vmatpush2.msra.mxu0 0.0
    %699 = vmatprep.subr.mxu0 0.0
    %700 = vmatpush2.msra.mxu0 0.0
    %701 = vmatprep.subr.mxu0 0.0
    %702 = vmatpush2.msra.mxu0 0.0
    %703 = vmatprep.subr.mxu0 0.0
    %704 = vmatpush2.msra.mxu0 0.0
    %705 = vmatprep.subr.mxu0 0.0
    %706 = vmatpush2.msra.mxu0 0.0
    %707 = vmatprep.subr.mxu0 0.0
    %708 = vmatpush2.msra.mxu0 0.0
    %709 = vmatprep.subr.mxu0 0.0
    %710 = vmatpush2.msra.mxu0 0.0
    %711 = vmatprep.subr.mxu0 0.0
    %712 = vmatpush2.msra.mxu0 0.0
    %713 = vmatprep.subr.mxu0 0.0
    %714 = vmatpush2.msra.mxu0 0.0
    %715 = vmatprep.subr.mxu0 0.0
    %716 = vmatpush2.msra.mxu0 0.0
    %717 = vmatprep.subr.mxu0 0.0
    %718 = vmatpush2.msra.mxu0 0.0
    %719 = vmatprep.mubr.f32.mxu0 0.0
    %720 = vmatmul.mubr.f32.gmra.mxu0 %v653
    %v721 = vpop.f32.mrf.mxu0
    %v722 = vadd.f32 %v650, %v721
    %v723 = vpop.f32.mrf.mxu0
    %724 = vdwg.mxu0
    %v725 = vtanh.pop %v722
    %v728 = vadd.s32 %v65, 4294967232
    %v729 = vlaneseq
    %v730 = vshrl.u32 %v729, 7
    %v731 = vsub.s32 %v728, %v730
    %v732 = vrot.slane %v524, %v731
    %v733 = vlaneseq
    %v734 = vshrl.u32 %v733, 7
    %v735 = vsub.s32 %v728, %v734
    %v736 = vrot.slane %v525, %v735
    %v737 = vsel %vm530, %v736, %v732
    %v739 = vsel %vm98, %v725, %v737
    %vm740 = vcmask 556032
    %v741 = vsel %vm740, %v739, 0.0
    %742 = vst [vmem:[%s18] sm:$0x3] %v741
    // Predicated region
    $region70: #{praline_forward.1} parent=1 // pred_check
      _
    $region71: #{praline_forward.1} parent=1 // pred_check_branch
      %744 = sbr.rel (0) target = $region73
    $region72: #{praline_forward.1} parent=1 // pred_region
      %s746 = ssub.s32 256, 256
      %747 = vsyncadd [#allocation4], %s746
      %s748 = sshll.u32 [#allocation3], 4
      %s749 = int_to_ptr.vmem [resolvable:$true] %s748
      %754 = dma.vmem_to_hbm [thread:$0]  %s749, 256, %s17, [#allocation4], 128, 128, 8
    $region73: #{praline_forward.1} parent=1 // pred_fallthru
      _
    // Predicated region
    $region74: #{praline_forward.1} parent=1 // pred_check
      _
    $region75: #{praline_forward.1} parent=1 // pred_check_branch
      %756 = sbr.rel (0) target = $region77
    $region76: #{praline_forward.1} parent=1 // pred_region
      _
    $region77: #{praline_forward.1} parent=1 // pred_fallthru
      _
    // Predicated region
    $region78: #{praline_forward.1} parent=1 // pred_check
      _
    $region79: #{praline_forward.1} parent=1 // pred_check_branch
      %758 = sbr.rel (0) target = $region81
    $region80: #{praline_forward.1} parent=1 // pred_region
      %759 = dma.done [#allocation4], 256
    $region81: #{praline_forward.1} parent=1 // pred_fallthru
      _
    // Predicated region
    $region82: #{praline_forward.1} parent=1 // pred_check
      _
    $region83: #{praline_forward.1} parent=1 // pred_check_branch
      %761 = sbr.rel (0) target = $region85
    $region84: #{praline_forward.1} parent=1 // pred_region
      _
    $region85: #{praline_forward.1} parent=1 // pred_fallthru
      _
    %762 = vsyncpa [#allocation4], 1

</llo_original>
